<compile_context>
chip_gen: v7x
topology: tpu7x:2x2x1
jax: 0.10.0
libtpu: 0.0.40
codegen_flags: <defaults>
</compile_context>

<pallas_src>
import functools

import jax
import jax.numpy as jnp
from jax.experimental import pallas as pl
from jax.experimental.pallas import tpu as pltpu


def _ceil_to(n, m):
    return ((n + m - 1) // m) * m


def linear_sigmoid_kernel(x_ref, w_ref, b_ref, o_ref):
    # x_ref: (Bp, Inp)   w_ref: (Inp, Outp) pre-transposed, lane-dense on Out
    # b_ref: (1, Outp)   o_ref: (Bp, Outp)
    logits = jnp.dot(x_ref[...], w_ref[...], preferred_element_type=jnp.float32)
    logits = logits + b_ref[...]
    # Exact sigmoid in f32 (exp runs on the EUP; the divide is cheap at this size).
    sig = 1.0 / (1.0 + jnp.exp(-logits))
    o_ref[...] = sig.astype(o_ref.dtype)


@functools.partial(jax.jit, static_argnames=("out_size",))
def _linear_sigmoid_jit(x, wp, bp, *, out_size):
    """sigmoid(x @ W + b) where wp/bp are already padded & pre-transposed."""
    B, In = x.shape
    Inp, Outp = wp.shape
    Bp = _ceil_to(max(B, 1), 8)

    # Single-op pad (fuses under jit); kernel sees (8,128)-aligned operands.
    xp = jnp.pad(x.astype(jnp.float32), ((0, Bp - B), (0, Inp - In)))

    out_padded = pl.pallas_call(
        linear_sigmoid_kernel,
        out_shape=jax.ShapeDtypeStruct((Bp, Outp), jnp.float32),
        in_specs=[
            pl.BlockSpec(memory_space=pltpu.MemorySpace.VMEM),
            pl.BlockSpec(memory_space=pltpu.MemorySpace.VMEM),
            pl.BlockSpec(memory_space=pltpu.MemorySpace.VMEM),
        ],
        out_specs=pl.BlockSpec(memory_space=pltpu.MemorySpace.VMEM),
    )(xp, wp, bp)

    # Padded rows/cols hold sigmoid(0 + pad-bias) garbage; slice them away.
    return out_padded[:B, :out_size]


class PallasPerceptron:
    """JAX/Pallas equivalent of the PyTorch Model (Linear -> sigmoid)."""

    def __init__(self, input_size, output_size, key):
        kw, kb = jax.random.split(key)
        # Mimic nn.Linear's uniform(-1/sqrt(in), 1/sqrt(in)) init.
        bound = 1.0 / jnp.sqrt(jnp.float32(input_size))
        self.weight = jax.random.uniform(
            kw, (output_size, input_size), jnp.float32, -bound, bound
        )
        self.bias = jax.random.uniform(
            kb, (output_size,), jnp.float32, -bound, bound
        )
        self.input_size = int(input_size)
        self.output_size = int(output_size)

        # Constants per model: pre-transpose + zero-pad ONCE (lane-dense on Out).
        inp = _ceil_to(max(input_size, 1), 128)
        outp = _ceil_to(max(output_size, 1), 128)
        self.wp = jnp.pad(
            self.weight.astype(jnp.float32).T,
            ((0, inp - input_size), (0, outp - output_size)),
        )
        self.bp = jnp.pad(
            self.bias.astype(jnp.float32), (0, outp - output_size)
        ).reshape(1, outp)

    def forward(self, x):
        return _linear_sigmoid_jit(x, self.wp, self.bp, out_size=self.output_size)

    def predict(self, x):
        # Mirrors the torch predict(): only valid for a single scalar prediction.
        pred = self.forward(x)
        if pred.size != 1:
            raise ValueError("predict() requires a single-element prediction")
        return int(pred.reshape(()) >= 0.5)


if __name__ == "__main__":
    key = jax.random.PRNGKey(0)
    k_model, k_x = jax.random.split(key)

    batch = 2
    input_size = 32
    output_size = 8

    model = PallasPerceptron(input_size, output_size, k_model)
    x = jax.random.normal(k_x, (batch, input_size), jnp.float32)

    out = model.forward(x)
    out = jax.block_until_ready(out)

    # Reference check in plain JAX (exact sigmoid; tolerance covers MXU f32 rounding).
    ref = jax.nn.sigmoid(x @ model.weight.T + model.bias)
    assert out.shape == (batch, output_size)
    assert jnp.allclose(out, ref, atol=1e-4, rtol=1e-4), "mismatch vs reference"

    print("KERNEL_OK")
</pallas_src>

<mosaic_0001>
module attributes {stable_mosaic.version = 11 : i64} {
  func.func @linear_sigmoid_kernel(%arg0: memref<8x128xf32, #tpu.memory_space<vmem>>, %arg1: memref<128x128xf32, #tpu.memory_space<vmem>>, %arg2: memref<1x128xf32, #tpu.memory_space<vmem>>, %arg3: memref<8x128xf32, #tpu.memory_space<vmem>>) attributes {dimension_semantics = [], scalar_prefetch = 0 : i64, scratch_operands = 0 : i64, tpu.core_type = #tpu.core_type<tc>} {
    %c0 = arith.constant 0 : index
    %c0_0 = arith.constant 0 : index
    %0 = vector.load %arg0[%c0, %c0_0] : memref<8x128xf32, #tpu.memory_space<vmem>>, vector<8x128xf32>
    %c0_1 = arith.constant 0 : index
    %c0_2 = arith.constant 0 : index
    %1 = vector.load %arg1[%c0_1, %c0_2] : memref<128x128xf32, #tpu.memory_space<vmem>>, vector<128x128xf32>
    %cst = arith.constant dense<0.000000e+00> : vector<8x128xf32>
    %2 = tpu.matmul %0, %1, %cst {dimension_numbers = #tpu.dot_dimension_numbers<[1], [0], [0], [1], [0, 0, 1, 1], [], []>} : vector<8x128xf32>, vector<128x128xf32>, vector<8x128xf32> -> vector<8x128xf32>
    %c0_3 = arith.constant 0 : index
    %c0_4 = arith.constant 0 : index
    %3 = vector.load %arg2[%c0_3, %c0_4] : memref<1x128xf32, #tpu.memory_space<vmem>>, vector<1x128xf32>
    %4 = vector.broadcast %3 : vector<1x128xf32> to vector<8x128xf32>
    %5 = arith.addf %2, %4 : vector<8x128xf32>
    %cst_5 = arith.constant 0.000000e+00 : f32
    %6 = vector.broadcast %cst_5 : f32 to vector<8x128xf32>
    %7 = arith.subf %6, %5 : vector<8x128xf32>
    %8 = math.exp %7 : vector<8x128xf32>
    %cst_6 = arith.constant 1.000000e+00 : f32
    %9 = vector.broadcast %cst_6 : f32 to vector<8x128xf32>
    %10 = arith.addf %9, %8 : vector<8x128xf32>
    %cst_7 = arith.constant 1.000000e+00 : f32
    %11 = vector.broadcast %cst_7 : f32 to vector<8x128xf32>
    %12 = arith.divf %11, %10 : vector<8x128xf32>
    %c0_8 = arith.constant 0 : index
    %c0_9 = arith.constant 0 : index
    %13 = vector.load %arg3[%c0_8, %c0_9] : memref<8x128xf32, #tpu.memory_space<vmem>>, vector<8x128xf32>
    tpu.vector_store %arg3[%c0_8, %c0_9], %12 {strides = array<i32>} : memref<8x128xf32, #tpu.memory_space<vmem>>, vector<8x128xf32>,
    return
  }
}

</mosaic_0001>

<llo_original>
// kernel: _linear_sigmoid_jit.1
$region0: #{_linear_sigmoid_jit.1}
  #allocation0 [shape = 'u32[]', space=smem, size = 0x4, offset = 0x4, fixed_abs, tag = 'smem constant byte address 0x4 - core index']
  #allocation1 [shape = 'u32[144,128]{1,0:T(1,128)}', space=vmem, size = 0x12000, scoped, tag = 'internal scratch']
  %s0 = inlined_call_operand.vmem [shape: f32[8,128], index: 0, kind: input, shape index: {}]
  %s1 = inlined_call_operand.hbm [shape: f32[128,128], index: 1, kind: input, shape index: {}]
  %s2 = inlined_call_operand.vmem [shape: f32[1,128], index: 2, kind: input, shape index: {}]
  %s3 = inlined_call_operand.vmem [shape: f32[8,128], index: 3, kind: output, shape index: {}]
  %s4 = sld [smem:[#allocation0]]
  $region26: #{_linear_sigmoid_jit.1} parent=0
    _
  %s6 = ssub.s32 1, %s4
  %s7 = scalar_select 0, %s6, %s4
  $region1: #{_linear_sigmoid_jit.1} parent=0
    #allocation2 [shape = 'u8[65536]{0}', space=vmem, size = 0x10000, scoped, tag = 'input window, operand 1, single buffered']
    #allocation3 [shape = 's32[1]{0}', space=sflag, size = 0x4, scoped, tag = 'scoped memory for _linear_sigmoid_jit.1']
    %8 = vsyncpa [#allocation3], 0
    // Predicated region
    $region2: #{_linear_sigmoid_jit.1} parent=1 // pred_check
      _
    $region3: #{_linear_sigmoid_jit.1} parent=1 // pred_check_branch
      %10 = sbr.rel (0) target = $region5
    $region4: #{_linear_sigmoid_jit.1} parent=1 // pred_region
      _
    $region5: #{_linear_sigmoid_jit.1} parent=1 // pred_fallthru
      _
    // Predicated region
    $region6: #{_linear_sigmoid_jit.1} parent=1 // pred_check
      _
    $region7: #{_linear_sigmoid_jit.1} parent=1 // pred_check_branch
      %12 = sbr.rel (0) target = $region9
    $region8: #{_linear_sigmoid_jit.1} parent=1 // pred_region
      %s14 = ssub.s32 2048, 2048
      %15 = vsyncadd [#allocation3], %s14
      %s16 = sshll.u32 [#allocation2], 4
      %s17 = int_to_ptr.vmem [resolvable:$true] %s16
      %22 = dma.hbm_to_vmem [thread:$0]  %s1, 2048, %s17, [#allocation3], 128, 128, 8
    $region9: #{_linear_sigmoid_jit.1} parent=1 // pred_fallthru
      _
    // Predicated region
    $region10: #{_linear_sigmoid_jit.1} parent=1 // pred_check
      _
    $region11: #{_linear_sigmoid_jit.1} parent=1 // pred_check_branch
      %24 = sbr.rel (0) target = $region13
    $region12: #{_linear_sigmoid_jit.1} parent=1 // pred_region
      _
    $region13: #{_linear_sigmoid_jit.1} parent=1 // pred_fallthru
      _
    // Predicated region
    $region14: #{_linear_sigmoid_jit.1} parent=1 // pred_check
      _
    $region15: #{_linear_sigmoid_jit.1} parent=1 // pred_check_branch
      %26 = sbr.rel (0) target = $region17
    $region16: #{_linear_sigmoid_jit.1} parent=1 // pred_region
      %27 = dma.done [#allocation3], 2048
    $region17: #{_linear_sigmoid_jit.1} parent=1 // pred_fallthru
      _
    %v28 = vld [vmem:[%s0] sm:$0xff]
    %v29 = vld [vmem:[#allocation2] sm:$0xff]
    %v30 = vld [vmem:[#allocation2 + $0x8] sm:$0xff]
    %v31 = vld [vmem:[#allocation2 + $0x10] sm:$0xff]
    %v32 = vld [vmem:[#allocation2 + $0x18] sm:$0xff]
    %v33 = vld [vmem:[#allocation2 + $0x20] sm:$0xff]
    %v34 = vld [vmem:[#allocation2 + $0x28] sm:$0xff]
    %v35 = vld [vmem:[#allocation2 + $0x30] sm:$0xff]
    %v36 = vld [vmem:[#allocation2 + $0x38] sm:$0xff]
    %v37 = vld [vmem:[#allocation2 + $0x40] sm:$0xff]
    %v38 = vld [vmem:[#allocation2 + $0x48] sm:$0xff]
    %v39 = vld [vmem:[#allocation2 + $0x50] sm:$0xff]
    %v40 = vld [vmem:[#allocation2 + $0x58] sm:$0xff]
    %v41 = vld [vmem:[#allocation2 + $0x60] sm:$0xff]
    %v42 = vld [vmem:[#allocation2 + $0x68] sm:$0xff]
    %v43 = vld [vmem:[#allocation2 + $0x70] sm:$0xff]
    %v44 = vld [vmem:[#allocation2 + $0x78] sm:$0xff]
    %v45 = vld [vmem:[%s2] sm:$0x1]
    %v47 = vlaneseq
    %v48 = vshrl.u32 %v47, 7
    %v49 = vsub.s32 0, %v48
    %v50 = vrot.slane %v45, %v49
    %52 = vmatprep.subr.mxu0 0.0
    %53 = vmatpush1.msra.mxu0 %v29
    %54 = vmatprep.subr.mxu0 0.0
    %55 = vmatpush1.msra.mxu0 %v30
    %56 = vmatprep.subr.mxu0 0.0
    %57 = vmatpush1.msra.mxu0 %v31
    %58 = vmatprep.subr.mxu0 0.0
    %59 = vmatpush1.msra.mxu0 %v32
    %60 = vmatprep.subr.mxu0 0.0
    %61 = vmatpush1.msra.mxu0 %v33
    %62 = vmatprep.subr.mxu0 0.0
    %63 = vmatpush1.msra.mxu0 %v34
    %64 = vmatprep.subr.mxu0 0.0
    %65 = vmatpush1.msra.mxu0 %v35
    %66 = vmatprep.subr.mxu0 0.0
    %67 = vmatpush1.msra.mxu0 %v36
    %68 = vmatprep.subr.mxu0 0.0
    %69 = vmatpush1.msra.mxu0 %v37
    %70 = vmatprep.subr.mxu0 0.0
    %71 = vmatpush1.msra.mxu0 %v38
    %72 = vmatprep.subr.mxu0 0.0
    %73 = vmatpush1.msra.mxu0 %v39
    %74 = vmatprep.subr.mxu0 0.0
    %75 = vmatpush1.msra.mxu0 %v40
    %76 = vmatprep.subr.mxu0 0.0
    %77 = vmatpush1.msra.mxu0 %v41
    %78 = vmatprep.subr.mxu0 0.0
    %79 = vmatpush1.msra.mxu0 %v42
    %80 = vmatprep.subr.mxu0 0.0
    %81 = vmatpush1.msra.mxu0 %v43
    %82 = vmatprep.subr.mxu0 0.0
    %83 = vmatpush1.msra.mxu0 %v44
    %84 = vmatprep.subr.mxu0 0.0
    %85 = vmatpush1.msra.mxu0 0.0
    %86 = vmatprep.subr.mxu0 0.0
    %87 = vmatpush1.msra.mxu0 0.0
    %88 = vmatprep.subr.mxu0 0.0
    %89 = vmatpush1.msra.mxu0 0.0
    %90 = vmatprep.subr.mxu0 0.0
    %91 = vmatpush1.msra.mxu0 0.0
    %92 = vmatprep.subr.mxu0 0.0
    %93 = vmatpush1.msra.mxu0 0.0
    %94 = vmatprep.subr.mxu0 0.0
    %95 = vmatpush1.msra.mxu0 0.0
    %96 = vmatprep.subr.mxu0 0.0
    %97 = vmatpush1.msra.mxu0 0.0
    %98 = vmatprep.subr.mxu0 0.0
    %99 = vmatpush1.msra.mxu0 0.0
    %100 = vmatprep.subr.mxu0 0.0
    %101 = vmatpush1.msra.mxu0 0.0
    %102 = vmatprep.subr.mxu0 0.0
    %103 = vmatpush1.msra.mxu0 0.0
    %104 = vmatprep.subr.mxu0 0.0
    %105 = vmatpush1.msra.mxu0 0.0
    %106 = vmatprep.subr.mxu0 0.0
    %107 = vmatpush1.msra.mxu0 0.0
    %108 = vmatprep.subr.mxu0 0.0
    %109 = vmatpush1.msra.mxu0 0.0
    %110 = vmatprep.subr.mxu0 0.0
    %111 = vmatpush1.msra.mxu0 0.0
    %112 = vmatprep.subr.mxu0 0.0
    %113 = vmatpush1.msra.mxu0 0.0
    %114 = vmatprep.subr.mxu0 0.0
    %115 = vmatpush1.msra.mxu0 0.0
    %116 = vmatprep.mubr.f32.mxu0 0.0
    %117 = vmatmul.mubr.f32.gmra.mrb[0].mxu0 %v28
    %v118 = vpop.f32.mrb[0].mxu0
    %v119 = vadd.f32 %v50, %v118
    %v120 = vpop.f32.mrb[0].mxu0
    %121 = vdwg.mxu0
    %v122 = vsub.f32 0.0, %v119
    %v123 = vmul.f32 %v122, 1.442695
    %v124 = vpow.pop %v123
    %v125 = vadd.f32 %v124, 1.0
    %v126 = vrcp.pop %v125
    %v127 = vmul.f32 1.0, %v126
    %128 = vst [vmem:[%s3] sm:$0xff] %v127
    // Predicated region
    $region18: #{_linear_sigmoid_jit.1} parent=1 // pred_check
      _
    $region19: #{_linear_sigmoid_jit.1} parent=1 // pred_check_branch
      %130 = sbr.rel (0) target = $region21
    $region20: #{_linear_sigmoid_jit.1} parent=1 // pred_region
      _
    $region21: #{_linear_sigmoid_jit.1} parent=1 // pred_fallthru
      _
    // Predicated region
    $region22: #{_linear_sigmoid_jit.1} parent=1 // pred_check
      _
    $region23: #{_linear_sigmoid_jit.1} parent=1 // pred_check_branch
      %132 = sbr.rel (0) target = $region25
    $region24: #{_linear_sigmoid_jit.1} parent=1 // pred_region
      _
    $region25: #{_linear_sigmoid_jit.1} parent=1 // pred_fallthru
      _
    %133 = vsyncpa [#allocation3], 1

</llo_original>
